<compile_context>
chip_gen: v5e
topology: v5e:2x2
jax: 0.10.0
libtpu: 0.0.40
codegen_flags: <defaults>
</compile_context>

<pallas_src>
import math

import jax
import jax.numpy as jnp
from jax.experimental import pallas as pl
from jax.experimental.pallas import tpu as pltpu


# ----------------------------------------------------------------------------
# Kernel: out[b, :] = sin(x[b] * [omega | omega] + [0 | pi/2])
# ----------------------------------------------------------------------------
def _sinusoidal_kernel(x_ref, o_ref):
    """x_ref: (B_padded,) f32 in SMEM (full array).  o_ref: (TB, D) f32 VMEM block."""
    tb, d = o_ref.shape
    dh = d // 2

    # Frequency / phase rows generated in-kernel (no input DMA).
    lane = jax.lax.broadcasted_iota(jnp.int32, (1, d), 1)               # 0 .. D-1
    second = lane >= dh                                                  # cos half
    k = (jnp.where(second, lane - dh, lane) + 1).astype(jnp.float32)     # 1..D/2 twice
    freq = jnp.exp(k * jnp.float32(-2.0 * math.log(10000.0) / d))        # 1/10000^(2k/D)
    phase = jnp.where(second, jnp.float32(math.pi / 2.0), jnp.float32(0.0))

    base = pl.program_id(0) * tb
    # TB is small and static: unrolled per-row scalar broadcast from SMEM.
    for b in range(tb):
        xv = x_ref[base + b]                           # f32 scalar from SMEM
        row = jnp.sin(xv * freq + phase)               # (1, D): one full-lane sin
        o_ref[pl.ds(b, 1), :] = row.astype(o_ref.dtype)


def sinusoidal_position_embeddings(x, embedding_size, *, block_rows=8):
    """x: (B,) -> (B, embedding_size), matching the PyTorch module (float32)."""
    assert embedding_size % 2 == 0
    b = x.shape[0]
    d = embedding_size
    tb = block_rows
    bp = ((b + tb - 1) // tb) * tb                      # pad batch to a multiple of TB

    xf = x.astype(jnp.float32)
    if bp != b:
        xf = jnp.pad(xf, (0, bp - b))

    out = pl.pallas_call(
        _sinusoidal_kernel,
        out_shape=jax.ShapeDtypeStruct((bp, d), jnp.float32),
        grid=(bp // tb,),
        in_specs=[pl.BlockSpec(memory_space=pltpu.MemorySpace.SMEM)],   # x: scalars in SMEM
        out_specs=pl.BlockSpec((tb, d), lambda i: (i, 0)),              # lane-dense output
        compiler_params=pltpu.CompilerParams(
            dimension_semantics=("parallel",)),
    )(xf)
    return out[:b] if bp != b else out


# ----------------------------------------------------------------------------
# Plain-JAX reference (direct sin/cos + concat, faithful to the PyTorch module)
# ----------------------------------------------------------------------------
def _reference(x, embedding_size):
    dh = embedding_size // 2
    k = jnp.arange(1, dh + 1, dtype=jnp.float32)
    omega = 1.0 / (10000.0 ** (2.0 * k / float(embedding_size)))
    ot = x.astype(jnp.float32)[:, None] * omega[None, :]
    return jnp.concatenate([jnp.sin(ot), jnp.cos(ot)], axis=-1)


if __name__ == "__main__":
    key = jax.random.PRNGKey(0)

    B = 8                 # batch of noise-step counts
    D = 128               # embedding_size (even; one full-lane row)

    # Deterministic "noise step" inputs, like diffusion timestep indices.
    steps = jax.random.randint(key, (B,), 0, 1000).astype(jnp.float32)

    out = jax.block_until_ready(sinusoidal_position_embeddings(steps, D))

    assert out.shape == (B, D)
    assert bool(jnp.all(jnp.isfinite(out)))

    ref = _reference(steps, D)
    # cos is computed as sin(z + pi/2); at arguments ~1e3 the f32 rounding of the
    # phase add / exponent path gives up to ~1e-4 abs deviation from direct cos.
    assert bool(jnp.allclose(out, ref, atol=5e-4, rtol=1e-4))

    print("KERNEL_OK")
</pallas_src>

<mosaic_0001>
module attributes {stable_mosaic.version = 11 : i64} {
  func.func @_sinusoidal_kernel(%arg0: i32, %arg1: memref<8xf32, #tpu.memory_space<smem>>, %arg2: memref<8x128xf32, #tpu.memory_space<vmem>>) attributes {dimension_semantics = [#tpu.dimension_semantics<parallel>], iteration_bounds = array<i64: 1>, scalar_prefetch = 0 : i64, scratch_operands = 0 : i64, tpu.core_type = #tpu.core_type<tc>, window_params = [{transform_indices = @transform_0, window_bounds = array<i64: 8>}, {transform_indices = @transform_1, window_bounds = array<i64: 8, 128>}]} {
    %0 = tpu.iota {dimensions = array<i32: 1>} : vector<1x128xi32>
    %c64_i32 = arith.constant 64 : i32
    %1 = vector.broadcast %c64_i32 : i32 to vector<1x128xi32>
    %2 = arith.cmpi sge, %0, %1 : vector<1x128xi32>
    %c64_i32_0 = arith.constant 64 : i32
    %3 = vector.broadcast %c64_i32_0 : i32 to vector<1x128xi32>
    %4 = arith.subi %0, %3 : vector<1x128xi32>
    %5 = arith.select %2, %4, %0 : vector<1x128xi1>, vector<1x128xi32>
    %c1_i32 = arith.constant 1 : i32
    %6 = vector.broadcast %c1_i32 : i32 to vector<1x128xi32>
    %7 = arith.addi %5, %6 : vector<1x128xi32>
    %8 = arith.sitofp %7 : vector<1x128xi32> to vector<1x128xf32>
    %cst = arith.constant -0.14391157 : f32
    %9 = vector.broadcast %cst : f32 to vector<1x128xf32>
    %10 = arith.mulf %8, %9 : vector<1x128xf32>
    %11 = math.exp %10 : vector<1x128xf32>
    %cst_1 = arith.constant 1.57079637 : f32
    %cst_2 = arith.constant 0.000000e+00 : f32
    %12 = vector.broadcast %cst_1 : f32 to vector<1x128xf32>
    %13 = vector.broadcast %cst_2 : f32 to vector<1x128xf32>
    %14 = arith.select %2, %12, %13 : vector<1x128xi1>, vector<1x128xf32>
    %c8_i32 = arith.constant 8 : i32
    %15 = arith.muli %arg0, %c8_i32 : i32
    %c0_i32 = arith.constant 0 : i32
    %16 = arith.addi %15, %c0_i32 : i32
    %17 = arith.index_cast %16 : i32 to index
    %18 = memref.load %arg1[%17] : memref<8xf32, #tpu.memory_space<smem>>
    %19 = vector.broadcast %18 : f32 to vector<1x128xf32>
    %20 = arith.mulf %19, %11 : vector<1x128xf32>
    %21 = arith.addf %20, %14 : vector<1x128xf32>
    %22 = math.sin %21 : vector<1x128xf32>
    %c0 = arith.constant 0 : index
    %c0_3 = arith.constant 0 : index
    %23 = vector.load %arg2[%c0, %c0_3] : memref<8x128xf32, #tpu.memory_space<vmem>>, vector<1x128xf32>
    tpu.vector_store %arg2[%c0, %c0_3], %22 {strides = array<i32>} : memref<8x128xf32, #tpu.memory_space<vmem>>, vector<1x128xf32>,
    %c1_i32_4 = arith.constant 1 : i32
    %24 = arith.addi %15, %c1_i32_4 : i32
    %25 = arith.index_cast %24 : i32 to index
    %26 = memref.load %arg1[%25] : memref<8xf32, #tpu.memory_space<smem>>
    %27 = vector.broadcast %26 : f32 to vector<1x128xf32>
    %28 = arith.mulf %27, %11 : vector<1x128xf32>
    %29 = arith.addf %28, %14 : vector<1x128xf32>
    %30 = math.sin %29 : vector<1x128xf32>
    %c1 = arith.constant 1 : index
    %c0_5 = arith.constant 0 : index
    %31 = vector.load %arg2[%c1, %c0_5] : memref<8x128xf32, #tpu.memory_space<vmem>>, vector<1x128xf32>
    tpu.vector_store %arg2[%c1, %c0_5], %30 {strides = array<i32>} : memref<8x128xf32, #tpu.memory_space<vmem>>, vector<1x128xf32>,
    %c2_i32 = arith.constant 2 : i32
    %32 = arith.addi %15, %c2_i32 : i32
    %33 = arith.index_cast %32 : i32 to index
    %34 = memref.load %arg1[%33] : memref<8xf32, #tpu.memory_space<smem>>
    %35 = vector.broadcast %34 : f32 to vector<1x128xf32>
    %36 = arith.mulf %35, %11 : vector<1x128xf32>
    %37 = arith.addf %36, %14 : vector<1x128xf32>
    %38 = math.sin %37 : vector<1x128xf32>
    %c2 = arith.constant 2 : index
    %c0_6 = arith.constant 0 : index
    %39 = vector.load %arg2[%c2, %c0_6] : memref<8x128xf32, #tpu.memory_space<vmem>>, vector<1x128xf32>
    tpu.vector_store %arg2[%c2, %c0_6], %38 {strides = array<i32>} : memref<8x128xf32, #tpu.memory_space<vmem>>, vector<1x128xf32>,
    %c3_i32 = arith.constant 3 : i32
    %40 = arith.addi %15, %c3_i32 : i32
    %41 = arith.index_cast %40 : i32 to index
    %42 = memref.load %arg1[%41] : memref<8xf32, #tpu.memory_space<smem>>
    %43 = vector.broadcast %42 : f32 to vector<1x128xf32>
    %44 = arith.mulf %43, %11 : vector<1x128xf32>
    %45 = arith.addf %44, %14 : vector<1x128xf32>
    %46 = math.sin %45 : vector<1x128xf32>
    %c3 = arith.constant 3 : index
    %c0_7 = arith.constant 0 : index
    %47 = vector.load %arg2[%c3, %c0_7] : memref<8x128xf32, #tpu.memory_space<vmem>>, vector<1x128xf32>
    tpu.vector_store %arg2[%c3, %c0_7], %46 {strides = array<i32>} : memref<8x128xf32, #tpu.memory_space<vmem>>, vector<1x128xf32>,
    %c4_i32 = arith.constant 4 : i32
    %48 = arith.addi %15, %c4_i32 : i32
    %49 = arith.index_cast %48 : i32 to index
    %50 = memref.load %arg1[%49] : memref<8xf32, #tpu.memory_space<smem>>
    %51 = vector.broadcast %50 : f32 to vector<1x128xf32>
    %52 = arith.mulf %51, %11 : vector<1x128xf32>
    %53 = arith.addf %52, %14 : vector<1x128xf32>
    %54 = math.sin %53 : vector<1x128xf32>
    %c4 = arith.constant 4 : index
    %c0_8 = arith.constant 0 : index
    %55 = vector.load %arg2[%c4, %c0_8] : memref<8x128xf32, #tpu.memory_space<vmem>>, vector<1x128xf32>
    tpu.vector_store %arg2[%c4, %c0_8], %54 {strides = array<i32>} : memref<8x128xf32, #tpu.memory_space<vmem>>, vector<1x128xf32>,
    %c5_i32 = arith.constant 5 : i32
    %56 = arith.addi %15, %c5_i32 : i32
    %57 = arith.index_cast %56 : i32 to index
    %58 = memref.load %arg1[%57] : memref<8xf32, #tpu.memory_space<smem>>
    %59 = vector.broadcast %58 : f32 to vector<1x128xf32>
    %60 = arith.mulf %59, %11 : vector<1x128xf32>
    %61 = arith.addf %60, %14 : vector<1x128xf32>
    %62 = math.sin %61 : vector<1x128xf32>
    %c5 = arith.constant 5 : index
    %c0_9 = arith.constant 0 : index
    %63 = vector.load %arg2[%c5, %c0_9] : memref<8x128xf32, #tpu.memory_space<vmem>>, vector<1x128xf32>
    tpu.vector_store %arg2[%c5, %c0_9], %62 {strides = array<i32>} : memref<8x128xf32, #tpu.memory_space<vmem>>, vector<1x128xf32>,
    %c6_i32 = arith.constant 6 : i32
    %64 = arith.addi %15, %c6_i32 : i32
    %65 = arith.index_cast %64 : i32 to index
    %66 = memref.load %arg1[%65] : memref<8xf32, #tpu.memory_space<smem>>
    %67 = vector.broadcast %66 : f32 to vector<1x128xf32>
    %68 = arith.mulf %67, %11 : vector<1x128xf32>
    %69 = arith.addf %68, %14 : vector<1x128xf32>
    %70 = math.sin %69 : vector<1x128xf32>
    %c6 = arith.constant 6 : index
    %c0_10 = arith.constant 0 : index
    %71 = vector.load %arg2[%c6, %c0_10] : memref<8x128xf32, #tpu.memory_space<vmem>>, vector<1x128xf32>
    tpu.vector_store %arg2[%c6, %c0_10], %70 {strides = array<i32>} : memref<8x128xf32, #tpu.memory_space<vmem>>, vector<1x128xf32>,
    %c7_i32 = arith.constant 7 : i32
    %72 = arith.addi %15, %c7_i32 : i32
    %73 = arith.index_cast %72 : i32 to index
    %74 = memref.load %arg1[%73] : memref<8xf32, #tpu.memory_space<smem>>
    %75 = vector.broadcast %74 : f32 to vector<1x128xf32>
    %76 = arith.mulf %75, %11 : vector<1x128xf32>
    %77 = arith.addf %76, %14 : vector<1x128xf32>
    %78 = math.sin %77 : vector<1x128xf32>
    %c7 = arith.constant 7 : index
    %c0_11 = arith.constant 0 : index
    %79 = vector.load %arg2[%c7, %c0_11] : memref<8x128xf32, #tpu.memory_space<vmem>>, vector<1x128xf32>
    tpu.vector_store %arg2[%c7, %c0_11], %78 {strides = array<i32>} : memref<8x128xf32, #tpu.memory_space<vmem>>, vector<1x128xf32>,
    return
  }
  func.func @transform_0(%arg0: i32) -> i32 {
    %c0_i32 = arith.constant 0 : i32
    %c0_i32_0 = arith.constant 0 : i32
    return %c0_i32 : i32
  }
  func.func @transform_1(%arg0: i32) -> (i32, i32) {
    %c0_i32 = arith.constant 0 : i32
    %c0_i32_0 = arith.constant 0 : i32
    return %arg0, %c0_i32 : i32, i32
  }
}

</mosaic_0001>

<llo_original>
// kernel: tpu_custom_call.1
$region0: #{tpu_custom_call.1}
  #allocation0 [shape = 'u32[]', space=smem, size = 0x4, offset = 0x4, fixed_abs, tag = 'smem constant byte address 0x4 - core index']
  #allocation1 [shape = 'u32[72,128]{1,0:T(1,128)}', space=vmem, size = 0x9000, scoped, tag = 'internal scratch']
  %s0 = inlined_call_operand.hbm [shape: f32[8], index: 0, kind: input, shape index: {}]
  %s1 = inlined_call_operand.hbm [shape: f32[8,128], index: 1, kind: output, shape index: {}]
  %s2 = sld [smem:[#allocation0]]
  $region18: #{tpu_custom_call.1} parent=0
    _
  %s4 = ssub.s32 1, %s2
  %s5 = scalar_select 0, %s4, %s2
  $region1: #{tpu_custom_call.1} parent=0
    #allocation2 [shape = 'u8[512]{0}', space=smem, size = 0x200, scoped, tag = 'input window, operand 0, single buffered']
    #allocation3 [shape = 's32[1]{0}', space=sflag, size = 0x4, scoped, tag = 'scoped memory for tpu_custom_call.1']
    #allocation4 [shape = 's32[1]{0}', space=sflag, size = 0x4, scoped, tag = 'scoped memory for tpu_custom_call.1']
    #allocation5 [shape = 'u8[4096]{0}', space=vmem, size = 0x1000, scoped, tag = 'output window, operand 0, single buffered']
    %6 = vsyncpa [#allocation4], 0
    %7 = vsyncpa [#allocation3], 0
    // Predicated region
    $region2: #{tpu_custom_call.1} parent=1 // pred_check
      _
    $region3: #{tpu_custom_call.1} parent=1 // pred_check_branch
      %9 = sbr.rel (0) target = $region5
    $region4: #{tpu_custom_call.1} parent=1 // pred_region
      %11 = vsyncadd [#allocation4], 0
      %s13 = sshll.u32 %s0, 4
      %s14 = int_to_ptr.hbm [resolvable:$true] %s13
      %16 = dma.hbm_to_smem %s14, 16, [#allocation2], [#allocation4]
    $region5: #{tpu_custom_call.1} parent=1 // pred_fallthru
      _
    // Predicated region
    $region6: #{tpu_custom_call.1} parent=1 // pred_check
      _
    $region7: #{tpu_custom_call.1} parent=1 // pred_check_branch
      %18 = sbr.rel (0) target = $region9
    $region8: #{tpu_custom_call.1} parent=1 // pred_region
      %20 = dma.done [#allocation4], 16
    $region9: #{tpu_custom_call.1} parent=1 // pred_fallthru
      _
    %21 = sfence
    %v22 = vlaneseq
    %v23 = vand.u32 %v22, 127
    %vm24 = vcmp.ge.s32.totalorder %v23, 64
    %v25 = vsub.s32 %v23, 64
    %v26 = vsel %vm24, %v25, %v23
    %v27 = vadd.s32 %v26, 1
    %v28 = vcvt.s32.f32 %v27
    %v29 = vmul.f32 %v28, -0.14391157
    %v30 = vmul.f32 %v29, 1.442695
    %v31 = vpow.pop %v30
    %v32 = vsel %vm24, 1.5707964, 0.0
    %s33 = smul.u32 0, 8
    %s34 = sld [smem:[#allocation2 + %s33]]
    %v35 = vstv %s34
    %v36 = vmul.f32 %v35, %v31
    %v37 = vadd.f32 %v36, %v32
    %v38 = vand.u32 2147483647, %v37
    %vm39 = vcmp.le.f32.partialorder %v38, 0.7853982
    %vm40 = vcmp.lt.s32.totalorder %v37, 0
    %v41 = vand.u32 %v37, 2139095040
    %v42 = vshrl.u32 %v41, 23
    %v43 = vsub.s32 %v42, 127
    %v44 = vand.u32 2147483647, %v37
    %v45 = vand.u32 %v44, 8388607
    %v46 = vor.u32 %v45, 8388608
    %v47 = vsub.s32 0, %v46
    %v48 = vadd.s32 %v43, 1
    %vm49 = vcmp.gt.s32.totalorder %v48, 0
    %v50 = vsel %vm49, %v48, 0
    %v51 = vshrl.u32 %v50, 5
    %v52 = vand.u32 %v50, 31
    %v53 = vsub.s32 32, %v52
    %v54 = vshrl.u32 683565275, %v53
    %v55 = vshll.u32 683565275, %v52
    %v56 = vshrl.u32 2475754826, %v53
    %v57 = vor.u32 %v55, %v56
    %v58 = vshll.u32 2475754826, %v52
    %v59 = vshrl.u32 2131351028, %v53
    %v60 = vor.u32 %v58, %v59
    %v61 = vshll.u32 2131351028, %v52
    %v62 = vshrl.u32 2102212464, %v53
    %v63 = vor.u32 %v61, %v62
    %v64 = vshll.u32 2102212464, %v52
    %v65 = vshrl.u32 920167782, %v53
    %v66 = vor.u32 %v64, %v65
    %v67 = vshll.u32 920167782, %v52
    %v68 = vshrl.u32 1326507024, %v53
    %v69 = vor.u32 %v67, %v68
    %vm70 = vcmp.lt.s32.totalorder %v51, 1
    %vm71 = vcmp.lt.s32.totalorder %v51, 2
    %vm72 = vcmp.lt.s32.totalorder %v51, 3
    %vm73 = vcmp.lt.s32.totalorder %v51, 4
    %v74 = vsel %vm70, %v54, %v57
    %v75 = vsel %vm73, %v63, 2102212464
    %v76 = vsel %vm72, %v60, %v75
    %v77 = vsel %vm71, %v74, %v76
    %v78 = vsel %vm70, %v57, %v60
    %v79 = vsel %vm73, %v66, 920167782
    %v80 = vsel %vm72, %v63, %v79
    %v81 = vsel %vm71, %v78, %v80
    %v82 = vsel %vm70, %v60, %v63
    %v83 = vsel %vm73, %v69, 1326507024
    %v84 = vsel %vm72, %v66, %v83
    %v85 = vsel %vm71, %v82, %v84
    %v86 = vshll.u32 %v46, 8
    %v87 = vand.u32 %v86, 65535
    %v88 = vshrl.u32 %v86, 16
    %v89 = vand.u32 %v85, 65535
    %v90 = vshrl.u32 %v85, 16
    %v91 = vmul.u32 %v87, %v89
    %v92 = vmul.u32 %v87, %v90
    %v93 = vmul.u32 %v88, %v89
    %v94 = vmul.u32 %v88, %v90
    %v95 = vshll.u32 %v92, 16
    %v96 = vshrl.u32 %v92, 16
    %v97 = vshll.u32 %v93, 16
    %v98 = vshrl.u32 %v93, 16
    %vm99 = vc.u32 %v91, %v95
    %v100 = vsel %vm99, 1, 0
    %v101 = vadd.s32 %v91, %v95
    %v102 = vadd.s32 %v94, %v100
    %vm103 = vc.u32 %v101, %v97
    %v104 = vsel %vm103, 1, 0
    %v105 = vadd.s32 %v101, %v97
    %v106 = vadd.s32 %v102, %v104
    %v107 = vadd.s32 %v106, %v96
    %v108 = vadd.s32 %v107, %v98
    %v109 = vand.u32 %v86, 65535
    %v110 = vshrl.u32 %v86, 16
    %v111 = vand.u32 %v81, 65535
    %v112 = vshrl.u32 %v81, 16
    %v113 = vmul.u32 %v109, %v111
    %v114 = vmul.u32 %v109, %v112
    %v115 = vmul.u32 %v110, %v111
    %v116 = vmul.u32 %v110, %v112
    %v117 = vshll.u32 %v114, 16
    %v118 = vshrl.u32 %v114, 16
    %v119 = vshll.u32 %v115, 16
    %v120 = vshrl.u32 %v115, 16
    %vm121 = vc.u32 %v113, %v117
    %v122 = vsel %vm121, 1, 0
    %v123 = vadd.s32 %v113, %v117
    %v124 = vadd.s32 %v116, %v122
    %vm125 = vc.u32 %v123, %v119
    %v126 = vsel %vm125, 1, 0
    %v127 = vadd.s32 %v123, %v119
    %v128 = vadd.s32 %v124, %v126
    %v129 = vadd.s32 %v128, %v118
    %v130 = vadd.s32 %v129, %v120
    %v131 = vmul.u32 %v86, %v77
    %v132 = vadd.s32 %v108, %v127
    %vm133 = vc.u32 %v108, %v127
    %v134 = vadd.s32 %v130, 1
    %v135 = vsel %vm133, %v134, %v130
    %v136 = vadd.s32 %v131, %v135
    %v137 = vadd.s32 %v136, 536870912
    %v138 = vshrl.u32 %v137, 30
    %v139 = vshll.u32 %v138, 30
    %v140 = vsub.s32 %v136, %v139
    %vm141 = vcmp.lt.s32.totalorder %v140, 0
    %v142 = vsub.s32 0, %v140
    %v143 = vsel %vm141, %v142, %v140
    %v144 = vclz %v143
    %v145 = vsub.s32 %v144, 2
    %vm146 = vcmp.gt.s32.totalorder 0, %v145
    %v147 = vsel %vm146, 0, %v145
    %v148 = vsub.s32 32, %v147
    %v149 = vshll.u32 %v140, %v147
    %v150 = vshrl.u32 %v132, %v148
    %v151 = vor.u32 %v149, %v150
    %v152 = vsub.s32 4294967266, %v147
    %v153 = vadd.s32 %v152, 127
    %v154 = vshll.u32 %v153, 23
    %v155 = vor.u32 4788187, %v154
    %v156 = vand.u32 2147483647, %v155
    %v158 = vcvt.s32.f32 %v151
    %v159 = vmul.f32 %v158, %v156
    %v160 = vxor.u32 %v159, 2147483648
    %v161 = vsel %vm40, %v160, %v159
    %v162 = vsub.s32 4, %v138
    %v163 = vsel %vm40, %v162, %v138
    %v164 = vsel %vm39, %v37, %v161
    %v165 = vsel %vm39, 0, %v163
    %v166 = vmul.f32 %v164, %v164
    %v167 = vmul.f32 %v166, -0.001358992
    %v168 = vadd.f32 %v167, 0.041655596
    %v169 = vmul.f32 %v166, %v168
    %v170 = vadd.f32 %v169, -0.4999988
    %v171 = vmul.f32 %v166, %v170
    %v172 = vadd.f32 1.0, %v171
    %v173 = vmul.f32 %v164, %v164
    %v174 = vmul.f32 %v173, -0.00019511016
    %v175 = vadd.f32 %v174, 0.008332121
    %v176 = vmul.f32 %v173, %v175
    %v177 = vadd.f32 %v176, -0.16666654
    %v178 = vmul.f32 %v173, %v177
    %v179 = vadd.f32 %v178, 1.0
    %v180 = vmul.f32 %v179, %v164
    %vm181 = vweird.f32 %v37
    %v182 = vadd.s32 %v165, 3
    %v183 = vand.u32 %v182, 3
    %vm184 = vcmp.lt.s32.totalorder %v183, 2
    %vm185 = vcmp.eq.s32.totalorder %v183, 0
    %v186 = vxor.u32 %v180, 2147483648
    %v187 = vsel %vm185, %v172, %v186
    %vm188 = vcmp.eq.s32.totalorder %v183, 2
    %v189 = vxor.u32 %v172, 2147483648
    %v190 = vsel %vm188, %v189, %v180
    %v191 = vsel %vm184, %v187, %v190
    %v192 = vsel %vm181, nan, %v191
    %193 = vst [vmem:[#allocation5] sm:$0x1] %v192
    %s194 = sadd.s32 %s33, 1
    %s195 = sld [smem:[#allocation2 + %s194]]
    %v196 = vstv %s195
    %v197 = vmul.f32 %v196, %v31
    %v198 = vadd.f32 %v197, %v32
    %v199 = vand.u32 2147483647, %v198
    %vm200 = vcmp.le.f32.partialorder %v199, 0.7853982
    %vm201 = vcmp.lt.s32.totalorder %v198, 0
    %v202 = vand.u32 %v198, 2139095040
    %v203 = vshrl.u32 %v202, 23
    %v204 = vsub.s32 %v203, 127
    %v205 = vand.u32 2147483647, %v198
    %v206 = vand.u32 %v205, 8388607
    %v207 = vor.u32 %v206, 8388608
    %v208 = vsub.s32 0, %v207
    %v209 = vadd.s32 %v204, 1
    %vm210 = vcmp.gt.s32.totalorder %v209, 0
    %v211 = vsel %vm210, %v209, 0
    %v212 = vshrl.u32 %v211, 5
    %v213 = vand.u32 %v211, 31
    %v214 = vsub.s32 32, %v213
    %v215 = vshrl.u32 683565275, %v214
    %v216 = vshll.u32 683565275, %v213
    %v217 = vshrl.u32 2475754826, %v214
    %v218 = vor.u32 %v216, %v217
    %v219 = vshll.u32 2475754826, %v213
    %v220 = vshrl.u32 2131351028, %v214
    %v221 = vor.u32 %v219, %v220
    %v222 = vshll.u32 2131351028, %v213
    %v223 = vshrl.u32 2102212464, %v214
    %v224 = vor.u32 %v222, %v223
    %v225 = vshll.u32 2102212464, %v213
    %v226 = vshrl.u32 920167782, %v214
    %v227 = vor.u32 %v225, %v226
    %v228 = vshll.u32 920167782, %v213
    %v229 = vshrl.u32 1326507024, %v214
    %v230 = vor.u32 %v228, %v229
    %vm231 = vcmp.lt.s32.totalorder %v212, 1
    %vm232 = vcmp.lt.s32.totalorder %v212, 2
    %vm233 = vcmp.lt.s32.totalorder %v212, 3
    %vm234 = vcmp.lt.s32.totalorder %v212, 4
    %v235 = vsel %vm231, %v215, %v218
    %v236 = vsel %vm234, %v224, 2102212464
    %v237 = vsel %vm233, %v221, %v236
    %v238 = vsel %vm232, %v235, %v237
    %v239 = vsel %vm231, %v218, %v221
    %v240 = vsel %vm234, %v227, 920167782
    %v241 = vsel %vm233, %v224, %v240
    %v242 = vsel %vm232, %v239, %v241
    %v243 = vsel %vm231, %v221, %v224
    %v244 = vsel %vm234, %v230, 1326507024
    %v245 = vsel %vm233, %v227, %v244
    %v246 = vsel %vm232, %v243, %v245
    %v247 = vshll.u32 %v207, 8
    %v248 = vand.u32 %v247, 65535
    %v249 = vshrl.u32 %v247, 16
    %v250 = vand.u32 %v246, 65535
    %v251 = vshrl.u32 %v246, 16
    %v252 = vmul.u32 %v248, %v250
    %v253 = vmul.u32 %v248, %v251
    %v254 = vmul.u32 %v249, %v250
    %v255 = vmul.u32 %v249, %v251
    %v256 = vshll.u32 %v253, 16
    %v257 = vshrl.u32 %v253, 16
    %v258 = vshll.u32 %v254, 16
    %v259 = vshrl.u32 %v254, 16
    %vm260 = vc.u32 %v252, %v256
    %v261 = vsel %vm260, 1, 0
    %v262 = vadd.s32 %v252, %v256
    %v263 = vadd.s32 %v255, %v261
    %vm264 = vc.u32 %v262, %v258
    %v265 = vsel %vm264, 1, 0
    %v266 = vadd.s32 %v262, %v258
    %v267 = vadd.s32 %v263, %v265
    %v268 = vadd.s32 %v267, %v257
    %v269 = vadd.s32 %v268, %v259
    %v270 = vand.u32 %v247, 65535
    %v271 = vshrl.u32 %v247, 16
    %v272 = vand.u32 %v242, 65535
    %v273 = vshrl.u32 %v242, 16
    %v274 = vmul.u32 %v270, %v272
    %v275 = vmul.u32 %v270, %v273
    %v276 = vmul.u32 %v271, %v272
    %v277 = vmul.u32 %v271, %v273
    %v278 = vshll.u32 %v275, 16
    %v279 = vshrl.u32 %v275, 16
    %v280 = vshll.u32 %v276, 16
    %v281 = vshrl.u32 %v276, 16
    %vm282 = vc.u32 %v274, %v278
    %v283 = vsel %vm282, 1, 0
    %v284 = vadd.s32 %v274, %v278
    %v285 = vadd.s32 %v277, %v283
    %vm286 = vc.u32 %v284, %v280
    %v287 = vsel %vm286, 1, 0
    %v288 = vadd.s32 %v284, %v280
    %v289 = vadd.s32 %v285, %v287
    %v290 = vadd.s32 %v289, %v279
    %v291 = vadd.s32 %v290, %v281
    %v292 = vmul.u32 %v247, %v238
    %v293 = vadd.s32 %v269, %v288
    %vm294 = vc.u32 %v269, %v288
    %v295 = vadd.s32 %v291, 1
    %v296 = vsel %vm294, %v295, %v291
    %v297 = vadd.s32 %v292, %v296
    %v298 = vadd.s32 %v297, 536870912
    %v299 = vshrl.u32 %v298, 30
    %v300 = vshll.u32 %v299, 30
    %v301 = vsub.s32 %v297, %v300
    %vm302 = vcmp.lt.s32.totalorder %v301, 0
    %v303 = vsub.s32 0, %v301
    %v304 = vsel %vm302, %v303, %v301
    %v305 = vclz %v304
    %v306 = vsub.s32 %v305, 2
    %vm307 = vcmp.gt.s32.totalorder 0, %v306
    %v308 = vsel %vm307, 0, %v306
    %v309 = vsub.s32 32, %v308
    %v310 = vshll.u32 %v301, %v308
    %v311 = vshrl.u32 %v293, %v309
    %v312 = vor.u32 %v310, %v311
    %v313 = vsub.s32 4294967266, %v308
    %v314 = vadd.s32 %v313, 127
    %v315 = vshll.u32 %v314, 23
    %v316 = vor.u32 4788187, %v315
    %v317 = vand.u32 2147483647, %v316
    %v319 = vcvt.s32.f32 %v312
    %v320 = vmul.f32 %v319, %v317
    %v321 = vxor.u32 %v320, 2147483648
    %v322 = vsel %vm201, %v321, %v320
    %v323 = vsub.s32 4, %v299
    %v324 = vsel %vm201, %v323, %v299
    %v325 = vsel %vm200, %v198, %v322
    %v326 = vsel %vm200, 0, %v324
    %v327 = vmul.f32 %v325, %v325
    %v328 = vmul.f32 %v327, -0.001358992
    %v329 = vadd.f32 %v328, 0.041655596
    %v330 = vmul.f32 %v327, %v329
    %v331 = vadd.f32 %v330, -0.4999988
    %v332 = vmul.f32 %v327, %v331
    %v333 = vadd.f32 1.0, %v332
    %v334 = vmul.f32 %v325, %v325
    %v335 = vmul.f32 %v334, -0.00019511016
    %v336 = vadd.f32 %v335, 0.008332121
    %v337 = vmul.f32 %v334, %v336
    %v338 = vadd.f32 %v337, -0.16666654
    %v339 = vmul.f32 %v334, %v338
    %v340 = vadd.f32 %v339, 1.0
    %v341 = vmul.f32 %v340, %v325
    %vm342 = vweird.f32 %v198
    %v343 = vadd.s32 %v326, 3
    %v344 = vand.u32 %v343, 3
    %vm345 = vcmp.lt.s32.totalorder %v344, 2
    %vm346 = vcmp.eq.s32.totalorder %v344, 0
    %v347 = vxor.u32 %v341, 2147483648
    %v348 = vsel %vm346, %v333, %v347
    %vm349 = vcmp.eq.s32.totalorder %v344, 2
    %v350 = vxor.u32 %v333, 2147483648
    %v351 = vsel %vm349, %v350, %v341
    %v352 = vsel %vm345, %v348, %v351
    %v353 = vsel %vm342, nan, %v352
    %354 = vst [vmem:[#allocation5 + $0x1] sm:$0x1] %v353
    %s355 = sadd.s32 %s33, 2
    %s356 = sld [smem:[#allocation2 + %s355]]
    %v357 = vstv %s356
    %v358 = vmul.f32 %v357, %v31
    %v359 = vadd.f32 %v358, %v32
    %v360 = vand.u32 2147483647, %v359
    %vm361 = vcmp.le.f32.partialorder %v360, 0.7853982
    %vm362 = vcmp.lt.s32.totalorder %v359, 0
    %v363 = vand.u32 %v359, 2139095040
    %v364 = vshrl.u32 %v363, 23
    %v365 = vsub.s32 %v364, 127
    %v366 = vand.u32 2147483647, %v359
    %v367 = vand.u32 %v366, 8388607
    %v368 = vor.u32 %v367, 8388608
    %v369 = vsub.s32 0, %v368
    %v370 = vadd.s32 %v365, 1
    %vm371 = vcmp.gt.s32.totalorder %v370, 0
    %v372 = vsel %vm371, %v370, 0
    %v373 = vshrl.u32 %v372, 5
    %v374 = vand.u32 %v372, 31
    %v375 = vsub.s32 32, %v374
    %v376 = vshrl.u32 683565275, %v375
    %v377 = vshll.u32 683565275, %v374
    %v378 = vshrl.u32 2475754826, %v375
    %v379 = vor.u32 %v377, %v378
    %v380 = vshll.u32 2475754826, %v374
    %v381 = vshrl.u32 2131351028, %v375
    %v382 = vor.u32 %v380, %v381
    %v383 = vshll.u32 2131351028, %v374
    %v384 = vshrl.u32 2102212464, %v375
    %v385 = vor.u32 %v383, %v384
    %v386 = vshll.u32 2102212464, %v374
    %v387 = vshrl.u32 920167782, %v375
    %v388 = vor.u32 %v386, %v387
    %v389 = vshll.u32 920167782, %v374
    %v390 = vshrl.u32 1326507024, %v375
    %v391 = vor.u32 %v389, %v390
    %vm392 = vcmp.lt.s32.totalorder %v373, 1
    %vm393 = vcmp.lt.s32.totalorder %v373, 2
    %vm394 = vcmp.lt.s32.totalorder %v373, 3
    %vm395 = vcmp.lt.s32.totalorder %v373, 4
    %v396 = vsel %vm392, %v376, %v379
    %v397 = vsel %vm395, %v385, 2102212464
    %v398 = vsel %vm394, %v382, %v397
    %v399 = vsel %vm393, %v396, %v398
    %v400 = vsel %vm392, %v379, %v382
    %v401 = vsel %vm395, %v388, 920167782
    %v402 = vsel %vm394, %v385, %v401
    %v403 = vsel %vm393, %v400, %v402
    %v404 = vsel %vm392, %v382, %v385
    %v405 = vsel %vm395, %v391, 1326507024
    %v406 = vsel %vm394, %v388, %v405
    %v407 = vsel %vm393, %v404, %v406
    %v408 = vshll.u32 %v368, 8
    %v409 = vand.u32 %v408, 65535
    %v410 = vshrl.u32 %v408, 16
    %v411 = vand.u32 %v407, 65535
    %v412 = vshrl.u32 %v407, 16
    %v413 = vmul.u32 %v409, %v411
    %v414 = vmul.u32 %v409, %v412
    %v415 = vmul.u32 %v410, %v411
    %v416 = vmul.u32 %v410, %v412
    %v417 = vshll.u32 %v414, 16
    %v418 = vshrl.u32 %v414, 16
    %v419 = vshll.u32 %v415, 16
    %v420 = vshrl.u32 %v415, 16
    %vm421 = vc.u32 %v413, %v417
    %v422 = vsel %vm421, 1, 0
    %v423 = vadd.s32 %v413, %v417
    %v424 = vadd.s32 %v416, %v422
    %vm425 = vc.u32 %v423, %v419
    %v426 = vsel %vm425, 1, 0
    %v427 = vadd.s32 %v423, %v419
    %v428 = vadd.s32 %v424, %v426
    %v429 = vadd.s32 %v428, %v418
    %v430 = vadd.s32 %v429, %v420
    %v431 = vand.u32 %v408, 65535
    %v432 = vshrl.u32 %v408, 16
    %v433 = vand.u32 %v403, 65535
    %v434 = vshrl.u32 %v403, 16
    %v435 = vmul.u32 %v431, %v433
    %v436 = vmul.u32 %v431, %v434
    %v437 = vmul.u32 %v432, %v433
    %v438 = vmul.u32 %v432, %v434
    %v439 = vshll.u32 %v436, 16
    %v440 = vshrl.u32 %v436, 16
    %v441 = vshll.u32 %v437, 16
    %v442 = vshrl.u32 %v437, 16
    %vm443 = vc.u32 %v435, %v439
    %v444 = vsel %vm443, 1, 0
    %v445 = vadd.s32 %v435, %v439
    %v446 = vadd.s32 %v438, %v444
    %vm447 = vc.u32 %v445, %v441
    %v448 = vsel %vm447, 1, 0
    %v449 = vadd.s32 %v445, %v441
    %v450 = vadd.s32 %v446, %v448
    %v451 = vadd.s32 %v450, %v440
    %v452 = vadd.s32 %v451, %v442
    %v453 = vmul.u32 %v408, %v399
    %v454 = vadd.s32 %v430, %v449
    %vm455 = vc.u32 %v430, %v449
    %v456 = vadd.s32 %v452, 1
    %v457 = vsel %vm455, %v456, %v452
    %v458 = vadd.s32 %v453, %v457
    %v459 = vadd.s32 %v458, 536870912
    %v460 = vshrl.u32 %v459, 30
    %v461 = vshll.u32 %v460, 30
    %v462 = vsub.s32 %v458, %v461
    %vm463 = vcmp.lt.s32.totalorder %v462, 0
    %v464 = vsub.s32 0, %v462
    %v465 = vsel %vm463, %v464, %v462
    %v466 = vclz %v465
    %v467 = vsub.s32 %v466, 2
    %vm468 = vcmp.gt.s32.totalorder 0, %v467
    %v469 = vsel %vm468, 0, %v467
    %v470 = vsub.s32 32, %v469
    %v471 = vshll.u32 %v462, %v469
    %v472 = vshrl.u32 %v454, %v470
    %v473 = vor.u32 %v471, %v472
    %v474 = vsub.s32 4294967266, %v469
    %v475 = vadd.s32 %v474, 127
    %v476 = vshll.u32 %v475, 23
    %v477 = vor.u32 4788187, %v476
    %v478 = vand.u32 2147483647, %v477
    %v480 = vcvt.s32.f32 %v473
    %v481 = vmul.f32 %v480, %v478
    %v482 = vxor.u32 %v481, 2147483648
    %v483 = vsel %vm362, %v482, %v481
    %v484 = vsub.s32 4, %v460
    %v485 = vsel %vm362, %v484, %v460
    %v486 = vsel %vm361, %v359, %v483
    %v487 = vsel %vm361, 0, %v485
    %v488 = vmul.f32 %v486, %v486
    %v489 = vmul.f32 %v488, -0.001358992
    %v490 = vadd.f32 %v489, 0.041655596
    %v491 = vmul.f32 %v488, %v490
    %v492 = vadd.f32 %v491, -0.4999988
    %v493 = vmul.f32 %v488, %v492
    %v494 = vadd.f32 1.0, %v493
    %v495 = vmul.f32 %v486, %v486
    %v496 = vmul.f32 %v495, -0.00019511016
    %v497 = vadd.f32 %v496, 0.008332121
    %v498 = vmul.f32 %v495, %v497
    %v499 = vadd.f32 %v498, -0.16666654
    %v500 = vmul.f32 %v495, %v499
    %v501 = vadd.f32 %v500, 1.0
    %v502 = vmul.f32 %v501, %v486
    %vm503 = vweird.f32 %v359
    %v504 = vadd.s32 %v487, 3
    %v505 = vand.u32 %v504, 3
    %vm506 = vcmp.lt.s32.totalorder %v505, 2
    %vm507 = vcmp.eq.s32.totalorder %v505, 0
    %v508 = vxor.u32 %v502, 2147483648
    %v509 = vsel %vm507, %v494, %v508
    %vm510 = vcmp.eq.s32.totalorder %v505, 2
    %v511 = vxor.u32 %v494, 2147483648
    %v512 = vsel %vm510, %v511, %v502
    %v513 = vsel %vm506, %v509, %v512
    %v514 = vsel %vm503, nan, %v513
    %515 = vst [vmem:[#allocation5 + $0x2] sm:$0x1] %v514
    %s516 = sadd.s32 %s33, 3
    %s517 = sld [smem:[#allocation2 + %s516]]
    %v518 = vstv %s517
    %v519 = vmul.f32 %v518, %v31
    %v520 = vadd.f32 %v519, %v32
    %v521 = vand.u32 2147483647, %v520
    %vm522 = vcmp.le.f32.partialorder %v521, 0.7853982
    %vm523 = vcmp.lt.s32.totalorder %v520, 0
    %v524 = vand.u32 %v520, 2139095040
    %v525 = vshrl.u32 %v524, 23
    %v526 = vsub.s32 %v525, 127
    %v527 = vand.u32 2147483647, %v520
    %v528 = vand.u32 %v527, 8388607
    %v529 = vor.u32 %v528, 8388608
    %v530 = vsub.s32 0, %v529
    %v531 = vadd.s32 %v526, 1
    %vm532 = vcmp.gt.s32.totalorder %v531, 0
    %v533 = vsel %vm532, %v531, 0
    %v534 = vshrl.u32 %v533, 5
    %v535 = vand.u32 %v533, 31
    %v536 = vsub.s32 32, %v535
    %v537 = vshrl.u32 683565275, %v536
    %v538 = vshll.u32 683565275, %v535
    %v539 = vshrl.u32 2475754826, %v536
    %v540 = vor.u32 %v538, %v539
    %v541 = vshll.u32 2475754826, %v535
    %v542 = vshrl.u32 2131351028, %v536
    %v543 = vor.u32 %v541, %v542
    %v544 = vshll.u32 2131351028, %v535
    %v545 = vshrl.u32 2102212464, %v536
    %v546 = vor.u32 %v544, %v545
    %v547 = vshll.u32 2102212464, %v535
    %v548 = vshrl.u32 920167782, %v536
    %v549 = vor.u32 %v547, %v548
    %v550 = vshll.u32 920167782, %v535
    %v551 = vshrl.u32 1326507024, %v536
    %v552 = vor.u32 %v550, %v551
    %vm553 = vcmp.lt.s32.totalorder %v534, 1
    %vm554 = vcmp.lt.s32.totalorder %v534, 2
    %vm555 = vcmp.lt.s32.totalorder %v534, 3
    %vm556 = vcmp.lt.s32.totalorder %v534, 4
    %v557 = vsel %vm553, %v537, %v540
    %v558 = vsel %vm556, %v546, 2102212464
    %v559 = vsel %vm555, %v543, %v558
    %v560 = vsel %vm554, %v557, %v559
    %v561 = vsel %vm553, %v540, %v543
    %v562 = vsel %vm556, %v549, 920167782
    %v563 = vsel %vm555, %v546, %v562
    %v564 = vsel %vm554, %v561, %v563
    %v565 = vsel %vm553, %v543, %v546
    %v566 = vsel %vm556, %v552, 1326507024
    %v567 = vsel %vm555, %v549, %v566
    %v568 = vsel %vm554, %v565, %v567
    %v569 = vshll.u32 %v529, 8
    %v570 = vand.u32 %v569, 65535
    %v571 = vshrl.u32 %v569, 16
    %v572 = vand.u32 %v568, 65535
    %v573 = vshrl.u32 %v568, 16
    %v574 = vmul.u32 %v570, %v572
    %v575 = vmul.u32 %v570, %v573
    %v576 = vmul.u32 %v571, %v572
    %v577 = vmul.u32 %v571, %v573
    %v578 = vshll.u32 %v575, 16
    %v579 = vshrl.u32 %v575, 16
    %v580 = vshll.u32 %v576, 16
    %v581 = vshrl.u32 %v576, 16
    %vm582 = vc.u32 %v574, %v578
    %v583 = vsel %vm582, 1, 0
    %v584 = vadd.s32 %v574, %v578
    %v585 = vadd.s32 %v577, %v583
    %vm586 = vc.u32 %v584, %v580
    %v587 = vsel %vm586, 1, 0
    %v588 = vadd.s32 %v584, %v580
    %v589 = vadd.s32 %v585, %v587
    %v590 = vadd.s32 %v589, %v579
    %v591 = vadd.s32 %v590, %v581
    %v592 = vand.u32 %v569, 65535
    %v593 = vshrl.u32 %v569, 16
    %v594 = vand.u32 %v564, 65535
    %v595 = vshrl.u32 %v564, 16
    %v596 = vmul.u32 %v592, %v594
    %v597 = vmul.u32 %v592, %v595
    %v598 = vmul.u32 %v593, %v594
    %v599 = vmul.u32 %v593, %v595
    %v600 = vshll.u32 %v597, 16
    %v601 = vshrl.u32 %v597, 16
    %v602 = vshll.u32 %v598, 16
    %v603 = vshrl.u32 %v598, 16
    %vm604 = vc.u32 %v596, %v600
    %v605 = vsel %vm604, 1, 0
    %v606 = vadd.s32 %v596, %v600
    %v607 = vadd.s32 %v599, %v605
    %vm608 = vc.u32 %v606, %v602
    %v609 = vsel %vm608, 1, 0
    %v610 = vadd.s32 %v606, %v602
    %v611 = vadd.s32 %v607, %v609
    %v612 = vadd.s32 %v611, %v601
    %v613 = vadd.s32 %v612, %v603
    %v614 = vmul.u32 %v569, %v560
    %v615 = vadd.s32 %v591, %v610
    %vm616 = vc.u32 %v591, %v610
    %v617 = vadd.s32 %v613, 1
    %v618 = vsel %vm616, %v617, %v613
    %v619 = vadd.s32 %v614, %v618
    %v620 = vadd.s32 %v619, 536870912
    %v621 = vshrl.u32 %v620, 30
    %v622 = vshll.u32 %v621, 30
    %v623 = vsub.s32 %v619, %v622
    %vm624 = vcmp.lt.s32.totalorder %v623, 0
    %v625 = vsub.s32 0, %v623
    %v626 = vsel %vm624, %v625, %v623
    %v627 = vclz %v626
    %v628 = vsub.s32 %v627, 2
    %vm629 = vcmp.gt.s32.totalorder 0, %v628
    %v630 = vsel %vm629, 0, %v628
    %v631 = vsub.s32 32, %v630
    %v632 = vshll.u32 %v623, %v630
    %v633 = vshrl.u32 %v615, %v631
    %v634 = vor.u32 %v632, %v633
    %v635 = vsub.s32 4294967266, %v630
    %v636 = vadd.s32 %v635, 127
    %v637 = vshll.u32 %v636, 23
    %v638 = vor.u32 4788187, %v637
    %v639 = vand.u32 2147483647, %v638
    %v641 = vcvt.s32.f32 %v634
    %v642 = vmul.f32 %v641, %v639
    %v643 = vxor.u32 %v642, 2147483648
    %v644 = vsel %vm523, %v643, %v642
    %v645 = vsub.s32 4, %v621
    %v646 = vsel %vm523, %v645, %v621
    %v647 = vsel %vm522, %v520, %v644
    %v648 = vsel %vm522, 0, %v646
    %v649 = vmul.f32 %v647, %v647
    %v650 = vmul.f32 %v649, -0.001358992
    %v651 = vadd.f32 %v650, 0.041655596
    %v652 = vmul.f32 %v649, %v651
    %v653 = vadd.f32 %v652, -0.4999988
    %v654 = vmul.f32 %v649, %v653
    %v655 = vadd.f32 1.0, %v654
    %v656 = vmul.f32 %v647, %v647
    %v657 = vmul.f32 %v656, -0.00019511016
    %v658 = vadd.f32 %v657, 0.008332121
    %v659 = vmul.f32 %v656, %v658
    %v660 = vadd.f32 %v659, -0.16666654
    %v661 = vmul.f32 %v656, %v660
    %v662 = vadd.f32 %v661, 1.0
    %v663 = vmul.f32 %v662, %v647
    %vm664 = vweird.f32 %v520
    %v665 = vadd.s32 %v648, 3
    %v666 = vand.u32 %v665, 3
    %vm667 = vcmp.lt.s32.totalorder %v666, 2
    %vm668 = vcmp.eq.s32.totalorder %v666, 0
    %v669 = vxor.u32 %v663, 2147483648
    %v670 = vsel %vm668, %v655, %v669
    %vm671 = vcmp.eq.s32.totalorder %v666, 2
    %v672 = vxor.u32 %v655, 2147483648
    %v673 = vsel %vm671, %v672, %v663
    %v674 = vsel %vm667, %v670, %v673
    %v675 = vsel %vm664, nan, %v674
    %676 = vst [vmem:[#allocation5 + $0x3] sm:$0x1] %v675
    %s677 = sadd.s32 %s33, 4
    %s678 = sld [smem:[#allocation2 + %s677]]
    %v679 = vstv %s678
    %v680 = vmul.f32 %v679, %v31
    %v681 = vadd.f32 %v680, %v32
    %v682 = vand.u32 2147483647, %v681
    %vm683 = vcmp.le.f32.partialorder %v682, 0.7853982
    %vm684 = vcmp.lt.s32.totalorder %v681, 0
    %v685 = vand.u32 %v681, 2139095040
    %v686 = vshrl.u32 %v685, 23
    %v687 = vsub.s32 %v686, 127
    %v688 = vand.u32 2147483647, %v681
    %v689 = vand.u32 %v688, 8388607
    %v690 = vor.u32 %v689, 8388608
    %v691 = vsub.s32 0, %v690
    %v692 = vadd.s32 %v687, 1
    %vm693 = vcmp.gt.s32.totalorder %v692, 0
    %v694 = vsel %vm693, %v692, 0
    %v695 = vshrl.u32 %v694, 5
    %v696 = vand.u32 %v694, 31
    %v697 = vsub.s32 32, %v696
    %v698 = vshrl.u32 683565275, %v697
    %v699 = vshll.u32 683565275, %v696
    %v700 = vshrl.u32 2475754826, %v697
    %v701 = vor.u32 %v699, %v700
    %v702 = vshll.u32 2475754826, %v696
    %v703 = vshrl.u32 2131351028, %v697
    %v704 = vor.u32 %v702, %v703
    %v705 = vshll.u32 2131351028, %v696
    %v706 = vshrl.u32 2102212464, %v697
    %v707 = vor.u32 %v705, %v706
    %v708 = vshll.u32 2102212464, %v696
    %v709 = vshrl.u32 920167782, %v697
    %v710 = vor.u32 %v708, %v709
    %v711 = vshll.u32 920167782, %v696
    %v712 = vshrl.u32 1326507024, %v697
    %v713 = vor.u32 %v711, %v712
    %vm714 = vcmp.lt.s32.totalorder %v695, 1
    %vm715 = vcmp.lt.s32.totalorder %v695, 2
    %vm716 = vcmp.lt.s32.totalorder %v695, 3
    %vm717 = vcmp.lt.s32.totalorder %v695, 4
    %v718 = vsel %vm714, %v698, %v701
    %v719 = vsel %vm717, %v707, 2102212464
    %v720 = vsel %vm716, %v704, %v719
    %v721 = vsel %vm715, %v718, %v720
    %v722 = vsel %vm714, %v701, %v704
    %v723 = vsel %vm717, %v710, 920167782
    %v724 = vsel %vm716, %v707, %v723
    %v725 = vsel %vm715, %v722, %v724
    %v726 = vsel %vm714, %v704, %v707
    %v727 = vsel %vm717, %v713, 1326507024
    %v728 = vsel %vm716, %v710, %v727
    %v729 = vsel %vm715, %v726, %v728
    %v730 = vshll.u32 %v690, 8
    %v731 = vand.u32 %v730, 65535
    %v732 = vshrl.u32 %v730, 16
    %v733 = vand.u32 %v729, 65535
    %v734 = vshrl.u32 %v729, 16
    %v735 = vmul.u32 %v731, %v733
    %v736 = vmul.u32 %v731, %v734
    %v737 = vmul.u32 %v732, %v733
    %v738 = vmul.u32 %v732, %v734
    %v739 = vshll.u32 %v736, 16
    %v740 = vshrl.u32 %v736, 16
    %v741 = vshll.u32 %v737, 16
    %v742 = vshrl.u32 %v737, 16
    %vm743 = vc.u32 %v735, %v739
    %v744 = vsel %vm743, 1, 0
    %v745 = vadd.s32 %v735, %v739
    %v746 = vadd.s32 %v738, %v744
    %vm747 = vc.u32 %v745, %v741
    %v748 = vsel %vm747, 1, 0
    %v749 = vadd.s32 %v745, %v741
    %v750 = vadd.s32 %v746, %v748
    %v751 = vadd.s32 %v750, %v740
    %v752 = vadd.s32 %v751, %v742
    %v753 = vand.u32 %v730, 65535
    %v754 = vshrl.u32 %v730, 16
    %v755 = vand.u32 %v725, 65535
    %v756 = vshrl.u32 %v725, 16
    %v757 = vmul.u32 %v753, %v755
    %v758 = vmul.u32 %v753, %v756
    %v759 = vmul.u32 %v754, %v755
    %v760 = vmul.u32 %v754, %v756
    %v761 = vshll.u32 %v758, 16
    %v762 = vshrl.u32 %v758, 16
    %v763 = vshll.u32 %v759, 16
    %v764 = vshrl.u32 %v759, 16
    %vm765 = vc.u32 %v757, %v761
    %v766 = vsel %vm765, 1, 0
    %v767 = vadd.s32 %v757, %v761
    %v768 = vadd.s32 %v760, %v766
    %vm769 = vc.u32 %v767, %v763
    %v770 = vsel %vm769, 1, 0
    %v771 = vadd.s32 %v767, %v763
    %v772 = vadd.s32 %v768, %v770
    %v773 = vadd.s32 %v772, %v762
    %v774 = vadd.s32 %v773, %v764
    %v775 = vmul.u32 %v730, %v721
    %v776 = vadd.s32 %v752, %v771
    %vm777 = vc.u32 %v752, %v771
    %v778 = vadd.s32 %v774, 1
    %v779 = vsel %vm777, %v778, %v774
    %v780 = vadd.s32 %v775, %v779
    %v781 = vadd.s32 %v780, 536870912
    %v782 = vshrl.u32 %v781, 30
    %v783 = vshll.u32 %v782, 30
    %v784 = vsub.s32 %v780, %v783
    %vm785 = vcmp.lt.s32.totalorder %v784, 0
    %v786 = vsub.s32 0, %v784
    %v787 = vsel %vm785, %v786, %v784
    %v788 = vclz %v787
    %v789 = vsub.s32 %v788, 2
    %vm790 = vcmp.gt.s32.totalorder 0, %v789
    %v791 = vsel %vm790, 0, %v789
    %v792 = vsub.s32 32, %v791
    %v793 = vshll.u32 %v784, %v791
    %v794 = vshrl.u32 %v776, %v792
    %v795 = vor.u32 %v793, %v794
    %v796 = vsub.s32 4294967266, %v791
    %v797 = vadd.s32 %v796, 127
    %v798 = vshll.u32 %v797, 23
    %v799 = vor.u32 4788187, %v798
    %v800 = vand.u32 2147483647, %v799
    %v802 = vcvt.s32.f32 %v795
    %v803 = vmul.f32 %v802, %v800
    %v804 = vxor.u32 %v803, 2147483648
    %v805 = vsel %vm684, %v804, %v803
    %v806 = vsub.s32 4, %v782
    %v807 = vsel %vm684, %v806, %v782
    %v808 = vsel %vm683, %v681, %v805
    %v809 = vsel %vm683, 0, %v807
    %v810 = vmul.f32 %v808, %v808
    %v811 = vmul.f32 %v810, -0.001358992
    %v812 = vadd.f32 %v811, 0.041655596
    %v813 = vmul.f32 %v810, %v812
    %v814 = vadd.f32 %v813, -0.4999988
    %v815 = vmul.f32 %v810, %v814
    %v816 = vadd.f32 1.0, %v815
    %v817 = vmul.f32 %v808, %v808
    %v818 = vmul.f32 %v817, -0.00019511016
    %v819 = vadd.f32 %v818, 0.008332121
    %v820 = vmul.f32 %v817, %v819
    %v821 = vadd.f32 %v820, -0.16666654
    %v822 = vmul.f32 %v817, %v821
    %v823 = vadd.f32 %v822, 1.0
    %v824 = vmul.f32 %v823, %v808
    %vm825 = vweird.f32 %v681
    %v826 = vadd.s32 %v809, 3
    %v827 = vand.u32 %v826, 3
    %vm828 = vcmp.lt.s32.totalorder %v827, 2
    %vm829 = vcmp.eq.s32.totalorder %v827, 0
    %v830 = vxor.u32 %v824, 2147483648
    %v831 = vsel %vm829, %v816, %v830
    %vm832 = vcmp.eq.s32.totalorder %v827, 2
    %v833 = vxor.u32 %v816, 2147483648
    %v834 = vsel %vm832, %v833, %v824
    %v835 = vsel %vm828, %v831, %v834
    %v836 = vsel %vm825, nan, %v835
    %837 = vst [vmem:[#allocation5 + $0x4] sm:$0x1] %v836
    %s838 = sadd.s32 %s33, 5
    %s839 = sld [smem:[#allocation2 + %s838]]
    %v840 = vstv %s839
    %v841 = vmul.f32 %v840, %v31
    %v842 = vadd.f32 %v841, %v32
    %v843 = vand.u32 2147483647, %v842
    %vm844 = vcmp.le.f32.partialorder %v843, 0.7853982
    %vm845 = vcmp.lt.s32.totalorder %v842, 0
    %v846 = vand.u32 %v842, 2139095040
    %v847 = vshrl.u32 %v846, 23
    %v848 = vsub.s32 %v847, 127
    %v849 = vand.u32 2147483647, %v842
    %v850 = vand.u32 %v849, 8388607
    %v851 = vor.u32 %v850, 8388608
    %v852 = vsub.s32 0, %v851
    %v853 = vadd.s32 %v848, 1
    %vm854 = vcmp.gt.s32.totalorder %v853, 0
    %v855 = vsel %vm854, %v853, 0
    %v856 = vshrl.u32 %v855, 5
    %v857 = vand.u32 %v855, 31
    %v858 = vsub.s32 32, %v857
    %v859 = vshrl.u32 683565275, %v858
    %v860 = vshll.u32 683565275, %v857
    %v861 = vshrl.u32 2475754826, %v858
    %v862 = vor.u32 %v860, %v861
    %v863 = vshll.u32 2475754826, %v857
    %v864 = vshrl.u32 2131351028, %v858
    %v865 = vor.u32 %v863, %v864
    %v866 = vshll.u32 2131351028, %v857
    %v867 = vshrl.u32 2102212464, %v858
    %v868 = vor.u32 %v866, %v867
    %v869 = vshll.u32 2102212464, %v857
    %v870 = vshrl.u32 920167782, %v858
    %v871 = vor.u32 %v869, %v870
    %v872 = vshll.u32 920167782, %v857
    %v873 = vshrl.u32 1326507024, %v858
    %v874 = vor.u32 %v872, %v873
    %vm875 = vcmp.lt.s32.totalorder %v856, 1
    %vm876 = vcmp.lt.s32.totalorder %v856, 2
    %vm877 = vcmp.lt.s32.totalorder %v856, 3
    %vm878 = vcmp.lt.s32.totalorder %v856, 4
    %v879 = vsel %vm875, %v859, %v862
    %v880 = vsel %vm878, %v868, 2102212464
    %v881 = vsel %vm877, %v865, %v880
    %v882 = vsel %vm876, %v879, %v881
    %v883 = vsel %vm875, %v862, %v865
    %v884 = vsel %vm878, %v871, 920167782
    %v885 = vsel %vm877, %v868, %v884
    %v886 = vsel %vm876, %v883, %v885
    %v887 = vsel %vm875, %v865, %v868
    %v888 = vsel %vm878, %v874, 1326507024
    %v889 = vsel %vm877, %v871, %v888
    %v890 = vsel %vm876, %v887, %v889
    %v891 = vshll.u32 %v851, 8
    %v892 = vand.u32 %v891, 65535
    %v893 = vshrl.u32 %v891, 16
    %v894 = vand.u32 %v890, 65535
    %v895 = vshrl.u32 %v890, 16
    %v896 = vmul.u32 %v892, %v894
    %v897 = vmul.u32 %v892, %v895
    %v898 = vmul.u32 %v893, %v894
    %v899 = vmul.u32 %v893, %v895
    %v900 = vshll.u32 %v897, 16
    %v901 = vshrl.u32 %v897, 16
    %v902 = vshll.u32 %v898, 16
    %v903 = vshrl.u32 %v898, 16
    %vm904 = vc.u32 %v896, %v900
    %v905 = vsel %vm904, 1, 0
    %v906 = vadd.s32 %v896, %v900
    %v907 = vadd.s32 %v899, %v905
    %vm908 = vc.u32 %v906, %v902
    %v909 = vsel %vm908, 1, 0
    %v910 = vadd.s32 %v906, %v902
    %v911 = vadd.s32 %v907, %v909
    %v912 = vadd.s32 %v911, %v901
    %v913 = vadd.s32 %v912, %v903
    %v914 = vand.u32 %v891, 65535
    %v915 = vshrl.u32 %v891, 16
    %v916 = vand.u32 %v886, 65535
    %v917 = vshrl.u32 %v886, 16
    %v918 = vmul.u32 %v914, %v916
    %v919 = vmul.u32 %v914, %v917
    %v920 = vmul.u32 %v915, %v916
    %v921 = vmul.u32 %v915, %v917
    %v922 = vshll.u32 %v919, 16
    %v923 = vshrl.u32 %v919, 16
    %v924 = vshll.u32 %v920, 16
    %v925 = vshrl.u32 %v920, 16
    %vm926 = vc.u32 %v918, %v922
    %v927 = vsel %vm926, 1, 0
    %v928 = vadd.s32 %v918, %v922
    %v929 = vadd.s32 %v921, %v927
    %vm930 = vc.u32 %v928, %v924
    %v931 = vsel %vm930, 1, 0
    %v932 = vadd.s32 %v928, %v924
    %v933 = vadd.s32 %v929, %v931
    %v934 = vadd.s32 %v933, %v923
    %v935 = vadd.s32 %v934, %v925
    %v936 = vmul.u32 %v891, %v882
    %v937 = vadd.s32 %v913, %v932
    %vm938 = vc.u32 %v913, %v932
    %v939 = vadd.s32 %v935, 1
    %v940 = vsel %vm938, %v939, %v935
    %v941 = vadd.s32 %v936, %v940
    %v942 = vadd.s32 %v941, 536870912
    %v943 = vshrl.u32 %v942, 30
    %v944 = vshll.u32 %v943, 30
    %v945 = vsub.s32 %v941, %v944
    %vm946 = vcmp.lt.s32.totalorder %v945, 0
    %v947 = vsub.s32 0, %v945
    %v948 = vsel %vm946, %v947, %v945
    %v949 = vclz %v948
    %v950 = vsub.s32 %v949, 2
    %vm951 = vcmp.gt.s32.totalorder 0, %v950
    %v952 = vsel %vm951, 0, %v950
    %v953 = vsub.s32 32, %v952
    %v954 = vshll.u32 %v945, %v952
    %v955 = vshrl.u32 %v937, %v953
    %v956 = vor.u32 %v954, %v955
    %v957 = vsub.s32 4294967266, %v952
    %v958 = vadd.s32 %v957, 127
    %v959 = vshll.u32 %v958, 23
    %v960 = vor.u32 4788187, %v959
    %v961 = vand.u32 2147483647, %v960
    %v963 = vcvt.s32.f32 %v956
    %v964 = vmul.f32 %v963, %v961
    %v965 = vxor.u32 %v964, 2147483648
    %v966 = vsel %vm845, %v965, %v964
    %v967 = vsub.s32 4, %v943
    %v968 = vsel %vm845, %v967, %v943
    %v969 = vsel %vm844, %v842, %v966
    %v970 = vsel %vm844, 0, %v968
    %v971 = vmul.f32 %v969, %v969
    %v972 = vmul.f32 %v971, -0.001358992
    %v973 = vadd.f32 %v972, 0.041655596
    %v974 = vmul.f32 %v971, %v973
    %v975 = vadd.f32 %v974, -0.4999988
    %v976 = vmul.f32 %v971, %v975
    %v977 = vadd.f32 1.0, %v976
    %v978 = vmul.f32 %v969, %v969
    %v979 = vmul.f32 %v978, -0.00019511016
    %v980 = vadd.f32 %v979, 0.008332121
    %v981 = vmul.f32 %v978, %v980
    %v982 = vadd.f32 %v981, -0.16666654
    %v983 = vmul.f32 %v978, %v982
    %v984 = vadd.f32 %v983, 1.0
    %v985 = vmul.f32 %v984, %v969
    %vm986 = vweird.f32 %v842
    %v987 = vadd.s32 %v970, 3
    %v988 = vand.u32 %v987, 3
    %vm989 = vcmp.lt.s32.totalorder %v988, 2
    %vm990 = vcmp.eq.s32.totalorder %v988, 0
    %v991 = vxor.u32 %v985, 2147483648
    %v992 = vsel %vm990, %v977, %v991
    %vm993 = vcmp.eq.s32.totalorder %v988, 2
    %v994 = vxor.u32 %v977, 2147483648
    %v995 = vsel %vm993, %v994, %v985
    %v996 = vsel %vm989, %v992, %v995
    %v997 = vsel %vm986, nan, %v996
    %998 = vst [vmem:[#allocation5 + $0x5] sm:$0x1] %v997
    %s999 = sadd.s32 %s33, 6
    %s1000 = sld [smem:[#allocation2 + %s999]]
    %v1001 = vstv %s1000
    %v1002 = vmul.f32 %v1001, %v31
    %v1003 = vadd.f32 %v1002, %v32
    %v1004 = vand.u32 2147483647, %v1003
    %vm1005 = vcmp.le.f32.partialorder %v1004, 0.7853982
    %vm1006 = vcmp.lt.s32.totalorder %v1003, 0
    %v1007 = vand.u32 %v1003, 2139095040
    %v1008 = vshrl.u32 %v1007, 23
    %v1009 = vsub.s32 %v1008, 127
    %v1010 = vand.u32 2147483647, %v1003
    %v1011 = vand.u32 %v1010, 8388607
    %v1012 = vor.u32 %v1011, 8388608
    %v1013 = vsub.s32 0, %v1012
    %v1014 = vadd.s32 %v1009, 1
    %vm1015 = vcmp.gt.s32.totalorder %v1014, 0
    %v1016 = vsel %vm1015, %v1014, 0
    %v1017 = vshrl.u32 %v1016, 5
    %v1018 = vand.u32 %v1016, 31
    %v1019 = vsub.s32 32, %v1018
    %v1020 = vshrl.u32 683565275, %v1019
    %v1021 = vshll.u32 683565275, %v1018
    %v1022 = vshrl.u32 2475754826, %v1019
    %v1023 = vor.u32 %v1021, %v1022
    %v1024 = vshll.u32 2475754826, %v1018
    %v1025 = vshrl.u32 2131351028, %v1019
    %v1026 = vor.u32 %v1024, %v1025
    %v1027 = vshll.u32 2131351028, %v1018
    %v1028 = vshrl.u32 2102212464, %v1019
    %v1029 = vor.u32 %v1027, %v1028
    %v1030 = vshll.u32 2102212464, %v1018
    %v1031 = vshrl.u32 920167782, %v1019
    %v1032 = vor.u32 %v1030, %v1031
    %v1033 = vshll.u32 920167782, %v1018
    %v1034 = vshrl.u32 1326507024, %v1019
    %v1035 = vor.u32 %v1033, %v1034
    %vm1036 = vcmp.lt.s32.totalorder %v1017, 1
    %vm1037 = vcmp.lt.s32.totalorder %v1017, 2
    %vm1038 = vcmp.lt.s32.totalorder %v1017, 3
    %vm1039 = vcmp.lt.s32.totalorder %v1017, 4
    %v1040 = vsel %vm1036, %v1020, %v1023
    %v1041 = vsel %vm1039, %v1029, 2102212464
    %v1042 = vsel %vm1038, %v1026, %v1041
    %v1043 = vsel %vm1037, %v1040, %v1042
    %v1044 = vsel %vm1036, %v1023, %v1026
    %v1045 = vsel %vm1039, %v1032, 920167782
    %v1046 = vsel %vm1038, %v1029, %v1045
    %v1047 = vsel %vm1037, %v1044, %v1046
    %v1048 = vsel %vm1036, %v1026, %v1029
    %v1049 = vsel %vm1039, %v1035, 1326507024
    %v1050 = vsel %vm1038, %v1032, %v1049
    %v1051 = vsel %vm1037, %v1048, %v1050
    %v1052 = vshll.u32 %v1012, 8
    %v1053 = vand.u32 %v1052, 65535
    %v1054 = vshrl.u32 %v1052, 16
    %v1055 = vand.u32 %v1051, 65535
    %v1056 = vshrl.u32 %v1051, 16
    %v1057 = vmul.u32 %v1053, %v1055
    %v1058 = vmul.u32 %v1053, %v1056
    %v1059 = vmul.u32 %v1054, %v1055
    %v1060 = vmul.u32 %v1054, %v1056
    %v1061 = vshll.u32 %v1058, 16
    %v1062 = vshrl.u32 %v1058, 16
    %v1063 = vshll.u32 %v1059, 16
    %v1064 = vshrl.u32 %v1059, 16
    %vm1065 = vc.u32 %v1057, %v1061
    %v1066 = vsel %vm1065, 1, 0
    %v1067 = vadd.s32 %v1057, %v1061
    %v1068 = vadd.s32 %v1060, %v1066
    %vm1069 = vc.u32 %v1067, %v1063
    %v1070 = vsel %vm1069, 1, 0
    %v1071 = vadd.s32 %v1067, %v1063
    %v1072 = vadd.s32 %v1068, %v1070
    %v1073 = vadd.s32 %v1072, %v1062
    %v1074 = vadd.s32 %v1073, %v1064
    %v1075 = vand.u32 %v1052, 65535
    %v1076 = vshrl.u32 %v1052, 16
    %v1077 = vand.u32 %v1047, 65535
    %v1078 = vshrl.u32 %v1047, 16
    %v1079 = vmul.u32 %v1075, %v1077
    %v1080 = vmul.u32 %v1075, %v1078
    %v1081 = vmul.u32 %v1076, %v1077
    %v1082 = vmul.u32 %v1076, %v1078
    %v1083 = vshll.u32 %v1080, 16
    %v1084 = vshrl.u32 %v1080, 16
    %v1085 = vshll.u32 %v1081, 16
    %v1086 = vshrl.u32 %v1081, 16
    %vm1087 = vc.u32 %v1079, %v1083
    %v1088 = vsel %vm1087, 1, 0
    %v1089 = vadd.s32 %v1079, %v1083
    %v1090 = vadd.s32 %v1082, %v1088
    %vm1091 = vc.u32 %v1089, %v1085
    %v1092 = vsel %vm1091, 1, 0
    %v1093 = vadd.s32 %v1089, %v1085
    %v1094 = vadd.s32 %v1090, %v1092
    %v1095 = vadd.s32 %v1094, %v1084
    %v1096 = vadd.s32 %v1095, %v1086
    %v1097 = vmul.u32 %v1052, %v1043
    %v1098 = vadd.s32 %v1074, %v1093
    %vm1099 = vc.u32 %v1074, %v1093
    %v1100 = vadd.s32 %v1096, 1
    %v1101 = vsel %vm1099, %v1100, %v1096
    %v1102 = vadd.s32 %v1097, %v1101
    %v1103 = vadd.s32 %v1102, 536870912
    %v1104 = vshrl.u32 %v1103, 30
    %v1105 = vshll.u32 %v1104, 30
    %v1106 = vsub.s32 %v1102, %v1105
    %vm1107 = vcmp.lt.s32.totalorder %v1106, 0
    %v1108 = vsub.s32 0, %v1106
    %v1109 = vsel %vm1107, %v1108, %v1106
    %v1110 = vclz %v1109
    %v1111 = vsub.s32 %v1110, 2
    %vm1112 = vcmp.gt.s32.totalorder 0, %v1111
    %v1113 = vsel %vm1112, 0, %v1111
    %v1114 = vsub.s32 32, %v1113
    %v1115 = vshll.u32 %v1106, %v1113
    %v1116 = vshrl.u32 %v1098, %v1114
    %v1117 = vor.u32 %v1115, %v1116
    %v1118 = vsub.s32 4294967266, %v1113
    %v1119 = vadd.s32 %v1118, 127
    %v1120 = vshll.u32 %v1119, 23
    %v1121 = vor.u32 4788187, %v1120
    %v1122 = vand.u32 2147483647, %v1121
    %v1124 = vcvt.s32.f32 %v1117
    %v1125 = vmul.f32 %v1124, %v1122
    %v1126 = vxor.u32 %v1125, 2147483648
    %v1127 = vsel %vm1006, %v1126, %v1125
    %v1128 = vsub.s32 4, %v1104
    %v1129 = vsel %vm1006, %v1128, %v1104
    %v1130 = vsel %vm1005, %v1003, %v1127
    %v1131 = vsel %vm1005, 0, %v1129
    %v1132 = vmul.f32 %v1130, %v1130
    %v1133 = vmul.f32 %v1132, -0.001358992
    %v1134 = vadd.f32 %v1133, 0.041655596
    %v1135 = vmul.f32 %v1132, %v1134
    %v1136 = vadd.f32 %v1135, -0.4999988
    %v1137 = vmul.f32 %v1132, %v1136
    %v1138 = vadd.f32 1.0, %v1137
    %v1139 = vmul.f32 %v1130, %v1130
    %v1140 = vmul.f32 %v1139, -0.00019511016
    %v1141 = vadd.f32 %v1140, 0.008332121
    %v1142 = vmul.f32 %v1139, %v1141
    %v1143 = vadd.f32 %v1142, -0.16666654
    %v1144 = vmul.f32 %v1139, %v1143
    %v1145 = vadd.f32 %v1144, 1.0
    %v1146 = vmul.f32 %v1145, %v1130
    %vm1147 = vweird.f32 %v1003
    %v1148 = vadd.s32 %v1131, 3
    %v1149 = vand.u32 %v1148, 3
    %vm1150 = vcmp.lt.s32.totalorder %v1149, 2
    %vm1151 = vcmp.eq.s32.totalorder %v1149, 0
    %v1152 = vxor.u32 %v1146, 2147483648
    %v1153 = vsel %vm1151, %v1138, %v1152
    %vm1154 = vcmp.eq.s32.totalorder %v1149, 2
    %v1155 = vxor.u32 %v1138, 2147483648
    %v1156 = vsel %vm1154, %v1155, %v1146
    %v1157 = vsel %vm1150, %v1153, %v1156
    %v1158 = vsel %vm1147, nan, %v1157
    %1159 = vst [vmem:[#allocation5 + $0x6] sm:$0x1] %v1158
    %s1160 = sadd.s32 %s33, 7
    %s1161 = sld [smem:[#allocation2 + %s1160]]
    %v1162 = vstv %s1161
    %v1163 = vmul.f32 %v1162, %v31
    %v1164 = vadd.f32 %v1163, %v32
    %v1165 = vand.u32 2147483647, %v1164
    %vm1166 = vcmp.le.f32.partialorder %v1165, 0.7853982
    %vm1167 = vcmp.lt.s32.totalorder %v1164, 0
    %v1168 = vand.u32 %v1164, 2139095040
    %v1169 = vshrl.u32 %v1168, 23
    %v1170 = vsub.s32 %v1169, 127
    %v1171 = vand.u32 2147483647, %v1164
    %v1172 = vand.u32 %v1171, 8388607
    %v1173 = vor.u32 %v1172, 8388608
    %v1174 = vsub.s32 0, %v1173
    %v1175 = vadd.s32 %v1170, 1
    %vm1176 = vcmp.gt.s32.totalorder %v1175, 0
    %v1177 = vsel %vm1176, %v1175, 0
    %v1178 = vshrl.u32 %v1177, 5
    %v1179 = vand.u32 %v1177, 31
    %v1180 = vsub.s32 32, %v1179
    %v1181 = vshrl.u32 683565275, %v1180
    %v1182 = vshll.u32 683565275, %v1179
    %v1183 = vshrl.u32 2475754826, %v1180
    %v1184 = vor.u32 %v1182, %v1183
    %v1185 = vshll.u32 2475754826, %v1179
    %v1186 = vshrl.u32 2131351028, %v1180
    %v1187 = vor.u32 %v1185, %v1186
    %v1188 = vshll.u32 2131351028, %v1179
    %v1189 = vshrl.u32 2102212464, %v1180
    %v1190 = vor.u32 %v1188, %v1189
    %v1191 = vshll.u32 2102212464, %v1179
    %v1192 = vshrl.u32 920167782, %v1180
    %v1193 = vor.u32 %v1191, %v1192
    %v1194 = vshll.u32 920167782, %v1179
    %v1195 = vshrl.u32 1326507024, %v1180
    %v1196 = vor.u32 %v1194, %v1195
    %vm1197 = vcmp.lt.s32.totalorder %v1178, 1
    %vm1198 = vcmp.lt.s32.totalorder %v1178, 2
    %vm1199 = vcmp.lt.s32.totalorder %v1178, 3
    %vm1200 = vcmp.lt.s32.totalorder %v1178, 4
    %v1201 = vsel %vm1197, %v1181, %v1184
    %v1202 = vsel %vm1200, %v1190, 2102212464
    %v1203 = vsel %vm1199, %v1187, %v1202
    %v1204 = vsel %vm1198, %v1201, %v1203
    %v1205 = vsel %vm1197, %v1184, %v1187
    %v1206 = vsel %vm1200, %v1193, 920167782
    %v1207 = vsel %vm1199, %v1190, %v1206
    %v1208 = vsel %vm1198, %v1205, %v1207
    %v1209 = vsel %vm1197, %v1187, %v1190
    %v1210 = vsel %vm1200, %v1196, 1326507024
    %v1211 = vsel %vm1199, %v1193, %v1210
    %v1212 = vsel %vm1198, %v1209, %v1211
    %v1213 = vshll.u32 %v1173, 8
    %v1214 = vand.u32 %v1213, 65535
    %v1215 = vshrl.u32 %v1213, 16
    %v1216 = vand.u32 %v1212, 65535
    %v1217 = vshrl.u32 %v1212, 16
    %v1218 = vmul.u32 %v1214, %v1216
    %v1219 = vmul.u32 %v1214, %v1217
    %v1220 = vmul.u32 %v1215, %v1216
    %v1221 = vmul.u32 %v1215, %v1217
    %v1222 = vshll.u32 %v1219, 16
    %v1223 = vshrl.u32 %v1219, 16
    %v1224 = vshll.u32 %v1220, 16
    %v1225 = vshrl.u32 %v1220, 16
    %vm1226 = vc.u32 %v1218, %v1222
    %v1227 = vsel %vm1226, 1, 0
    %v1228 = vadd.s32 %v1218, %v1222
    %v1229 = vadd.s32 %v1221, %v1227
    %vm1230 = vc.u32 %v1228, %v1224
    %v1231 = vsel %vm1230, 1, 0
    %v1232 = vadd.s32 %v1228, %v1224
    %v1233 = vadd.s32 %v1229, %v1231
    %v1234 = vadd.s32 %v1233, %v1223
    %v1235 = vadd.s32 %v1234, %v1225
    %v1236 = vand.u32 %v1213, 65535
    %v1237 = vshrl.u32 %v1213, 16
    %v1238 = vand.u32 %v1208, 65535
    %v1239 = vshrl.u32 %v1208, 16
    %v1240 = vmul.u32 %v1236, %v1238
    %v1241 = vmul.u32 %v1236, %v1239
    %v1242 = vmul.u32 %v1237, %v1238
    %v1243 = vmul.u32 %v1237, %v1239
    %v1244 = vshll.u32 %v1241, 16
    %v1245 = vshrl.u32 %v1241, 16
    %v1246 = vshll.u32 %v1242, 16
    %v1247 = vshrl.u32 %v1242, 16
    %vm1248 = vc.u32 %v1240, %v1244
    %v1249 = vsel %vm1248, 1, 0
    %v1250 = vadd.s32 %v1240, %v1244
    %v1251 = vadd.s32 %v1243, %v1249
    %vm1252 = vc.u32 %v1250, %v1246
    %v1253 = vsel %vm1252, 1, 0
    %v1254 = vadd.s32 %v1250, %v1246
    %v1255 = vadd.s32 %v1251, %v1253
    %v1256 = vadd.s32 %v1255, %v1245
    %v1257 = vadd.s32 %v1256, %v1247
    %v1258 = vmul.u32 %v1213, %v1204
    %v1259 = vadd.s32 %v1235, %v1254
    %vm1260 = vc.u32 %v1235, %v1254
    %v1261 = vadd.s32 %v1257, 1
    %v1262 = vsel %vm1260, %v1261, %v1257
    %v1263 = vadd.s32 %v1258, %v1262
    %v1264 = vadd.s32 %v1263, 536870912
    %v1265 = vshrl.u32 %v1264, 30
    %v1266 = vshll.u32 %v1265, 30
    %v1267 = vsub.s32 %v1263, %v1266
    %vm1268 = vcmp.lt.s32.totalorder %v1267, 0
    %v1269 = vsub.s32 0, %v1267
    %v1270 = vsel %vm1268, %v1269, %v1267
    %v1271 = vclz %v1270
    %v1272 = vsub.s32 %v1271, 2
    %vm1273 = vcmp.gt.s32.totalorder 0, %v1272
    %v1274 = vsel %vm1273, 0, %v1272
    %v1275 = vsub.s32 32, %v1274
    %v1276 = vshll.u32 %v1267, %v1274
    %v1277 = vshrl.u32 %v1259, %v1275
    %v1278 = vor.u32 %v1276, %v1277
    %v1279 = vsub.s32 4294967266, %v1274
    %v1280 = vadd.s32 %v1279, 127
    %v1281 = vshll.u32 %v1280, 23
    %v1282 = vor.u32 4788187, %v1281
    %v1283 = vand.u32 2147483647, %v1282
    %v1285 = vcvt.s32.f32 %v1278
    %v1286 = vmul.f32 %v1285, %v1283
    %v1287 = vxor.u32 %v1286, 2147483648
    %v1288 = vsel %vm1167, %v1287, %v1286
    %v1289 = vsub.s32 4, %v1265
    %v1290 = vsel %vm1167, %v1289, %v1265
    %v1291 = vsel %vm1166, %v1164, %v1288
    %v1292 = vsel %vm1166, 0, %v1290
    %v1293 = vmul.f32 %v1291, %v1291
    %v1294 = vmul.f32 %v1293, -0.001358992
    %v1295 = vadd.f32 %v1294, 0.041655596
    %v1296 = vmul.f32 %v1293, %v1295
    %v1297 = vadd.f32 %v1296, -0.4999988
    %v1298 = vmul.f32 %v1293, %v1297
    %v1299 = vadd.f32 1.0, %v1298
    %v1300 = vmul.f32 %v1291, %v1291
    %v1301 = vmul.f32 %v1300, -0.00019511016
    %v1302 = vadd.f32 %v1301, 0.008332121
    %v1303 = vmul.f32 %v1300, %v1302
    %v1304 = vadd.f32 %v1303, -0.16666654
    %v1305 = vmul.f32 %v1300, %v1304
    %v1306 = vadd.f32 %v1305, 1.0
    %v1307 = vmul.f32 %v1306, %v1291
    %vm1308 = vweird.f32 %v1164
    %v1309 = vadd.s32 %v1292, 3
    %v1310 = vand.u32 %v1309, 3
    %vm1311 = vcmp.lt.s32.totalorder %v1310, 2
    %vm1312 = vcmp.eq.s32.totalorder %v1310, 0
    %v1313 = vxor.u32 %v1307, 2147483648
    %v1314 = vsel %vm1312, %v1299, %v1313
    %vm1315 = vcmp.eq.s32.totalorder %v1310, 2
    %v1316 = vxor.u32 %v1299, 2147483648
    %v1317 = vsel %vm1315, %v1316, %v1307
    %v1318 = vsel %vm1311, %v1314, %v1317
    %v1319 = vsel %vm1308, nan, %v1318
    %1320 = vst [vmem:[#allocation5 + $0x7] sm:$0x1] %v1319
    // Predicated region
    $region10: #{tpu_custom_call.1} parent=1 // pred_check
      _
    $region11: #{tpu_custom_call.1} parent=1 // pred_check_branch
      %1322 = sbr.rel (0) target = $region13
    $region12: #{tpu_custom_call.1} parent=1 // pred_region
      %1324 = vsyncadd [#allocation3], 0
      %s1326 = sshll.u32 [#allocation5], 4
      %s1327 = int_to_ptr.vmem [resolvable:$true] %s1326
      %s1328 = sshll.u32 %s1, 4
      %s1329 = int_to_ptr.hbm [resolvable:$true] %s1328
      %1331 = dma.vmem_to_hbm [thread:$0]  %s1327, 128, %s1329, [#allocation3]
    $region13: #{tpu_custom_call.1} parent=1 // pred_fallthru
      _
    // Predicated region
    $region14: #{tpu_custom_call.1} parent=1 // pred_check
      _
    $region15: #{tpu_custom_call.1} parent=1 // pred_check_branch
      %1333 = sbr.rel (0) target = $region17
    $region16: #{tpu_custom_call.1} parent=1 // pred_region
      %1335 = dma.done [#allocation3], 128
    $region17: #{tpu_custom_call.1} parent=1 // pred_fallthru
      _
    %1336 = vsyncpa [#allocation3], 1
    %1337 = vsyncpa [#allocation4], 1

</llo_original>
